<compile_context>
chip_gen: v7x
topology: tpu7x:2x2x1
jax: 0.10.0
libtpu: 0.0.40
codegen_flags: <defaults>
</compile_context>

<pallas_src>
import functools

import jax
import jax.numpy as jnp
from jax.experimental import pallas as pl
from jax.experimental.pallas import tpu as pltpu


def _round_up(x: int, m: int) -> int:
    return ((x + m - 1) // m) * m


def _device_kind() -> str:
    try:
        return jax.devices()[0].device_kind.lower()
    except Exception:
        return ""


def _resident_spec(block_shape, index_map):
    """BlockSpec for (near-)constant blocks: single-buffered if supported.

    Weight/bias index maps are (near-)constant, so their second pipeline
    buffer is dead VMEM (~1-3.6 MB for ViT-L/G); pl.Buffered(1) frees it,
    which is headroom that goes straight into a larger TILE_M under v7x's
    64 MiB VMEM.  Falls back to a plain (double-buffered) spec if this jax
    version does not support pipeline_mode.
    """
    try:
        return pl.BlockSpec(block_shape, index_map, pipeline_mode=pl.Buffered(1))
    except Exception:
        return pl.BlockSpec(block_shape, index_map)


def _patch_proj_kernel(x_ref, w_ref, b_ref, o_ref):
    # x_ref: (TILE_M, K) patch tile; w_ref: (K, TILE_D) projection slice
    # (single-buffered, resident); b_ref: (1, TILE_D) f32 bias.
    # MXU matmul with f32 accumulation; the bias add is free VPU filler.
    acc = jnp.dot(x_ref[...], w_ref[...], preferred_element_type=jnp.float32)
    o_ref[...] = (acc + b_ref[...]).astype(o_ref.dtype)


# Scoped-VMEM budget: comfortably below v7x's 64 MiB physical VMEM, above the
# 32 MiB default scoped limit (v5e/v6e have 128 MiB physical, so this is safe
# everywhere).
_VMEM_CAP_BYTES = 48 * 1024 * 1024


def patch_proj_pallas(patches, weight2d, bias2d, out_dtype, *,
                      tile_m=None, tile_d=None, allow_input_fusion=False):
    """patches: (M, K) @ weight2d: (K, Dp) + bias2d: (1, Dp) -> (M, Dp)."""
    M, K = patches.shape
    Kw, Dp = weight2d.shape
    assert Kw == K and bias2d.shape == (1, Dp)

    in_b = jnp.dtype(patches.dtype).itemsize
    w_b = jnp.dtype(weight2d.dtype).itemsize
    out_b = jnp.dtype(out_dtype).itemsize
    f32_compute = in_b >= 4

    # --- D tiling: bounds the out tile and the implicit f32 acc temporary for
    # large embed dims (e.g. ViT-g D=1536) so TILE_M can stay large. ---------
    if tile_d is None:
        tile_d = Dp if Dp <= 1024 else 512
    tile_d = min(_round_up(tile_d, 128), Dp)

    # --- M tiling: big tiles amortize the ~0.35 us per-grid-step overhead
    # (M~43k at TILE_M=512 was ~86 steps of pure overhead) and push DMA
    # efficiency toward ~86% of HBM roofline.  f32 compute is capped at 2048
    # (v7x VMEM budget incl. the f32 acc temporary); bf16 may go to 4096. ----
    if tile_m is None:
        tile_m = 1024 if f32_compute else 2048
    tile_m = _round_up(max(tile_m, 8), 8)
    tile_m = min(tile_m, 2048 if f32_compute else 4096)
    tile_m = min(tile_m, _round_up(M, 8))

    def vmem_need(tm):
        return (2 * tm * K * in_b            # double-buffered x tile
                + 2 * K * tile_d * w_b       # weight (worst case: fallback spec)
                + 2 * tile_d * 4             # bias
                + 2 * tm * tile_d * out_b    # double-buffered out tile
                + tm * tile_d * 4)           # implicit f32 accumulator temporary

    while tile_m > 512 and vmem_need(tile_m) > _VMEM_CAP_BYTES:
        tile_m //= 2
    tile_m = max(8, _round_up(tile_m, 8))

    grid_m = pl.cdiv(M, tile_m)
    grid_d = pl.cdiv(Dp, tile_d)

    # Megacore: on v7x explicitly shard the independent M tiles across the two
    # TensorCores; plain PARALLEL elsewhere (single-TC v5e/v6e).
    kind = _device_kind()
    if "v7" in kind and grid_m % 2 == 0:
        m_sem = pltpu.CORE_PARALLEL
    else:
        m_sem = pltpu.PARALLEL

    cost = pl.CostEstimate(
        flops=2 * M * K * Dp,
        transcendentals=0,
        bytes_accessed=(M * K * in_b + K * Dp * w_b + Dp * 4 + M * Dp * out_b),
    )

    cp_kwargs = dict(
        dimension_semantics=(m_sem, pltpu.PARALLEL),
        vmem_limit_bytes=_VMEM_CAP_BYTES,
    )
    if allow_input_fusion:
        # TODO(synk): enable by default once the fused reshape/transpose
        # producer for the patch matrix is verified to lower on the target
        # Mosaic version (removes an input-sized HBM round trip on v6e/v7x).
        cp_kwargs["allow_input_fusion"] = [True, False, False]

    return pl.pallas_call(
        _patch_proj_kernel,
        out_shape=jax.ShapeDtypeStruct((M, Dp), out_dtype),
        grid_spec=pltpu.PrefetchScalarGridSpec(
            num_scalar_prefetch=0,
            # D is the inner axis so the (large) x tile is never re-DMA'd
            # while sweeping D tiles.
            grid=(grid_m, grid_d),
            in_specs=[
                pl.BlockSpec((tile_m, K), lambda i, j: (i, 0)),    # patch tile
                _resident_spec((K, tile_d), lambda i, j: (0, j)),  # weight slice
                _resident_spec((1, tile_d), lambda i, j: (0, j)),  # bias (f32)
            ],
            out_specs=pl.BlockSpec((tile_m, tile_d), lambda i, j: (i, j)),
        ),
        compiler_params=pltpu.CompilerParams(**cp_kwargs),
        cost_estimate=cost,
    )(patches, weight2d, bias2d)


@functools.partial(
    jax.jit,
    static_argnames=("patch_size", "flatten_embedding", "compute_dtype",
                     "out_dtype", "tile_m", "tile_d", "pad_k",
                     "allow_input_fusion"),
)
def patch_embed_forward(x, weight, bias, *, patch_size, flatten_embedding=True,
                        compute_dtype=jnp.bfloat16, out_dtype=None,
                        tile_m=None, tile_d=None, pad_k=None,
                        allow_input_fusion=False):
    """PatchEmbed.forward.

    x:      (B, C, H, W)   NCHW, like PyTorch.
    weight: (D, C, pH, pW) Conv2d weight.
    bias:   (D,)           Conv2d bias.
    compute_dtype: dtype fed to the MXU.  Default bf16 (recommended on
                   v5e/v6e/v7x; f32 accumulation preserved, matching the
                   PyTorch autocast path).  Pass jnp.float32 for exact f32.
    out_dtype: output dtype (None -> x.dtype).  bf16 halves the dominant
               output write on mem-bound v6e/v7x if downstream tolerates it.
    pad_k:  zero-pad K to a multiple of 128 (None -> auto: only on MXU-bound
            v5e, where K=588 wastes ~9% of MXU cycles).
    returns (B, N, D) if flatten_embedding else (B, H', W', D).
    """
    pH, pW = patch_size
    B, C, H, W = x.shape
    assert H % pH == 0 and W % pW == 0
    Hp, Wp = H // pH, W // pW
    D = weight.shape[0]
    K = C * pH * pW
    M = B * Hp * Wp

    out_dt = jnp.dtype(out_dtype) if out_dtype is not None else jnp.dtype(x.dtype)
    cdt = (jnp.dtype(compute_dtype) if compute_dtype is not None
           else jnp.dtype(x.dtype))

    # Cast before the patch-extraction transpose so the glue moves half the
    # bytes when the projection runs in bf16.
    xc = x.astype(cdt)
    wc = weight.astype(cdt)

    # --- glue: extract non-overlapping patches, column order (c, ph, pw) ----
    # TODO(synk): this transpose is materialized in HBM by XLA (~1 extra
    # input-sized round trip — the main remaining cost on mem-bound v6e/v7x).
    # Fuse it into the kernel's input DMA via allow_input_fusion=True once
    # verified, or switch the model to NHWC + strided BlockSpec reads.
    xp = xc.reshape(B, C, Hp, pH, Wp, pW)
    xp = jnp.transpose(xp, (0, 2, 4, 1, 3, 5))      # (B, Hp, Wp, C, pH, pW)
    patches = xp.reshape(M, K)                      # (M, K)

    # Conv2d weight (D, C, pH, pW) -> (K, D) so that patches @ w2d == conv.
    w2d = wc.reshape(D, K).T                        # (K, D)

    # v5e only: pad the contraction to a multiple of 128 (e.g. 588 -> 640) so
    # MXU passes are unpadded.  Not worth the extra HBM read on v6e/v7x.
    if pad_k is None:
        kind = _device_kind()
        pad_k = ("v5e" in kind) or ("v5 lite" in kind) or ("v5lite" in kind)
    if pad_k and K % 128 != 0:
        Kp = _round_up(K, 128)
        patches = jnp.pad(patches, ((0, 0), (0, Kp - K)))
        w2d = jnp.pad(w2d, ((0, Kp - K), (0, 0)))

    # Lane-dense output: pad D to a multiple of 128 so stores are unmasked
    # vst; slice afterwards.
    Dp = max(_round_up(D, 128), 128)
    if Dp != D:
        w2d = jnp.pad(w2d, ((0, 0), (0, Dp - D)))
        bias_p = jnp.pad(bias.astype(jnp.float32), (0, Dp - D))
    else:
        bias_p = bias.astype(jnp.float32)
    bias2d = bias_p.reshape(1, Dp)

    # --- hot path: tiled projection matmul in Pallas ------------------------
    out = patch_proj_pallas(patches, w2d, bias2d, out_dt,
                            tile_m=tile_m, tile_d=tile_d,
                            allow_input_fusion=allow_input_fusion)
    if Dp != D:
        out = out[:, :D]

    out = out.reshape(B, Hp * Wp, D)                # == flatten(2).transpose(1, 2)
    if not flatten_embedding:
        out = out.reshape(B, Hp, Wp, D)
    return out


if __name__ == "__main__":
    # Small, module-consistent shapes: img_size=16, patch_size=8, in_chans=4,
    # embed_dim=32  ->  x: (2, 4, 16, 16), output: (2, 4, 32).
    B, C, H, W = 2, 4, 16, 16
    pH = pW = 8
    D = 32

    key = jax.random.PRNGKey(0)
    kx, kw, kb = jax.random.split(key, 3)
    x = jax.random.normal(kx, (B, C, H, W), dtype=jnp.float32)
    weight = jax.random.normal(kw, (D, C, pH, pW), dtype=jnp.float32) * 0.02
    bias = jax.random.normal(kb, (D,), dtype=jnp.float32) * 0.02

    # XLA conv reference (same semantics as nn.Conv2d, stride=kernel).
    def conv_ref(xv, wv):
        r = jax.lax.conv_general_dilated(
            xv, wv, window_strides=(pH, pW), padding="VALID",
            dimension_numbers=("NCHW", "OIHW", "NCHW"))
        r = r + bias.reshape(1, D, 1, 1)
        return r.reshape(B, D, -1).transpose(0, 2, 1)   # (B, N, D)

    N = (H // pH) * (W // pW)

    # Exact f32 compute path — tight check.
    out32 = patch_embed_forward(x, weight, bias, patch_size=(pH, pW),
                                compute_dtype=jnp.float32)
    out32 = jax.block_until_ready(out32)
    ref32 = conv_ref(x, weight)
    assert out32.shape == (B, N, D)
    assert jnp.allclose(out32, ref32, atol=1e-4, rtol=1e-4)

    # Default bf16-compute path (recommended config on v5e/v6e/v7x) — compare
    # against a reference built from the same bf16-rounded inputs.
    out_bf = patch_embed_forward(x, weight, bias, patch_size=(pH, pW))
    out_bf = jax.block_until_ready(out_bf)
    xb = x.astype(jnp.bfloat16).astype(jnp.float32)
    wb = weight.astype(jnp.bfloat16).astype(jnp.float32)
    ref_bf = conv_ref(xb, wb)
    assert out_bf.shape == (B, N, D)
    assert jnp.allclose(out_bf, ref_bf, atol=5e-3, rtol=5e-3)

    # flatten_embedding=False path.
    out_nf = patch_embed_forward(x, weight, bias, patch_size=(pH, pW),
                                 flatten_embedding=False,
                                 compute_dtype=jnp.float32)
    out_nf = jax.block_until_ready(out_nf)
    assert out_nf.shape == (B, H // pH, W // pW, D)
    assert jnp.allclose(out_nf.reshape(B, N, D), ref32, atol=1e-4, rtol=1e-4)

    print("KERNEL_OK")
</pallas_src>

<mosaic_0001>
module attributes {stable_mosaic.version = 11 : i64} {
  func.func @_patch_proj_kernel(%arg0: i32, %arg1: i32, %arg2: memref<8x256xf32, #tpu.memory_space<vmem>>, %arg3: memref<256x128xf32, #tpu.memory_space<vmem>>, %arg4: memref<1x128xf32, #tpu.memory_space<vmem>>, %arg5: memref<8x128xf32, #tpu.memory_space<vmem>>) attributes {dimension_semantics = [#tpu.dimension_semantics<parallel>, #tpu.dimension_semantics<parallel>], iteration_bounds = array<i64: 1, 1>, scalar_prefetch = 0 : i64, scratch_operands = 0 : i64, tpu.core_type = #tpu.core_type<tc>, window_params = [{transform_indices = @transform_0, window_bounds = array<i64: 8, 256>}, {pipeline_mode = #tpu.pipeline_mode<synchronous>, transform_indices = @transform_1, window_bounds = array<i64: 256, 128>}, {pipeline_mode = #tpu.pipeline_mode<synchronous>, transform_indices = @transform_2, window_bounds = array<i64: 1, 128>}, {transform_indices = @transform_3, window_bounds = array<i64: 8, 128>}]} {
    %c0 = arith.constant 0 : index
    %c0_0 = arith.constant 0 : index
    %0 = vector.load %arg2[%c0, %c0_0] : memref<8x256xf32, #tpu.memory_space<vmem>>, vector<8x256xf32>
    %c0_1 = arith.constant 0 : index
    %c0_2 = arith.constant 0 : index
    %1 = vector.load %arg3[%c0_1, %c0_2] : memref<256x128xf32, #tpu.memory_space<vmem>>, vector<256x128xf32>
    %cst = arith.constant dense<0.000000e+00> : vector<8x128xf32>
    %2 = tpu.matmul %0, %1, %cst {dimension_numbers = #tpu.dot_dimension_numbers<[1], [0], [0], [1], [0, 0, 1, 1], [], []>} : vector<8x256xf32>, vector<256x128xf32>, vector<8x128xf32> -> vector<8x128xf32>
    %c0_3 = arith.constant 0 : index
    %c0_4 = arith.constant 0 : index
    %3 = vector.load %arg4[%c0_3, %c0_4] : memref<1x128xf32, #tpu.memory_space<vmem>>, vector<1x128xf32>
    %4 = vector.broadcast %3 : vector<1x128xf32> to vector<8x128xf32>
    %5 = arith.addf %2, %4 : vector<8x128xf32>
    %c0_5 = arith.constant 0 : index
    %c0_6 = arith.constant 0 : index
    %6 = vector.load %arg5[%c0_5, %c0_6] : memref<8x128xf32, #tpu.memory_space<vmem>>, vector<8x128xf32>
    tpu.vector_store %arg5[%c0_5, %c0_6], %5 {strides = array<i32>} : memref<8x128xf32, #tpu.memory_space<vmem>>, vector<8x128xf32>,
    return
  }
  func.func @transform_0(%arg0: i32, %arg1: i32) -> (i32, i32) {
    %c0_i32 = arith.constant 0 : i32
    %c0_i32_0 = arith.constant 0 : i32
    return %arg0, %c0_i32 : i32, i32
  }
  func.func @transform_1(%arg0: i32, %arg1: i32) -> (i32, i32) {
    %c0_i32 = arith.constant 0 : i32
    %c0_i32_0 = arith.constant 0 : i32
    return %c0_i32, %arg1 : i32, i32
  }
  func.func @transform_2(%arg0: i32, %arg1: i32) -> (i32, i32) {
    %c0_i32 = arith.constant 0 : i32
    %c0_i32_0 = arith.constant 0 : i32
    return %c0_i32, %arg1 : i32, i32
  }
  func.func @transform_3(%arg0: i32, %arg1: i32) -> (i32, i32) {
    %c0_i32 = arith.constant 0 : i32
    return %arg0, %arg1 : i32, i32
  }
}

</mosaic_0001>

<llo_original>
// kernel: patch_embed_forward.1
$region0: #{patch_embed_forward.1}
  #allocation0 [shape = 'u32[]', space=smem, size = 0x4, offset = 0x4, fixed_abs, tag = 'smem constant byte address 0x4 - core index']
  #allocation1 [shape = 'u32[144,128]{1,0:T(1,128)}', space=vmem, size = 0x12000, scoped, tag = 'internal scratch']
  %s0 = inlined_call_operand.vmem [shape: f32[8,256], index: 0, kind: input, shape index: {}]
  %s1 = inlined_call_operand.vmem [shape: f32[256,128], index: 1, kind: input, shape index: {}]
  %s2 = inlined_call_operand.vmem [shape: f32[1,128], index: 2, kind: input, shape index: {}]
  %s3 = inlined_call_operand.hbm [shape: f32[8,128], index: 3, kind: output, shape index: {}]
  %s4 = sld [smem:[#allocation0]]
  $region22: #{patch_embed_forward.1} parent=0
    _
  %s6 = ssub.s32 1, %s4
  %s7 = scalar_select 0, %s6, %s4
  $region1: #{patch_embed_forward.1} parent=0
    #allocation2 [shape = 'u8[4096]{0}', space=vmem, size = 0x1000, scoped, tag = 'output window, operand 0, single buffered']
    #allocation3 [shape = 's32[1]{0}', space=sflag, size = 0x4, scoped, tag = 'scoped memory for patch_embed_forward.1']
    %8 = vsyncpa [#allocation3], 0
    // Predicated region
    $region2: #{patch_embed_forward.1} parent=1 // pred_check
      _
    $region3: #{patch_embed_forward.1} parent=1 // pred_check_branch
      %10 = sbr.rel (0) target = $region5
    $region4: #{patch_embed_forward.1} parent=1 // pred_region
      _
    $region5: #{patch_embed_forward.1} parent=1 // pred_fallthru
      _
    // Predicated region
    $region6: #{patch_embed_forward.1} parent=1 // pred_check
      _
    $region7: #{patch_embed_forward.1} parent=1 // pred_check_branch
      %12 = sbr.rel (0) target = $region9
    $region8: #{patch_embed_forward.1} parent=1 // pred_region
      _
    $region9: #{patch_embed_forward.1} parent=1 // pred_fallthru
      _
    // Predicated region
    $region10: #{patch_embed_forward.1} parent=1 // pred_check
      _
    $region11: #{patch_embed_forward.1} parent=1 // pred_check_branch
      %14 = sbr.rel (0) target = $region13
    $region12: #{patch_embed_forward.1} parent=1 // pred_region
      _
    $region13: #{patch_embed_forward.1} parent=1 // pred_fallthru
      _
    %v15 = vld [vmem:[%s0] sm:$0xff]
    %v16 = vld [vmem:[%s0 + $0x8] sm:$0xff]
    %v17 = vld [vmem:[%s1] sm:$0xff]
    %v18 = vld [vmem:[%s1 + $0x8] sm:$0xff]
    %v19 = vld [vmem:[%s1 + $0x10] sm:$0xff]
    %v20 = vld [vmem:[%s1 + $0x18] sm:$0xff]
    %v21 = vld [vmem:[%s1 + $0x20] sm:$0xff]
    %v22 = vld [vmem:[%s1 + $0x28] sm:$0xff]
    %v23 = vld [vmem:[%s1 + $0x30] sm:$0xff]
    %v24 = vld [vmem:[%s1 + $0x38] sm:$0xff]
    %v25 = vld [vmem:[%s1 + $0x40] sm:$0xff]
    %v26 = vld [vmem:[%s1 + $0x48] sm:$0xff]
    %v27 = vld [vmem:[%s1 + $0x50] sm:$0xff]
    %v28 = vld [vmem:[%s1 + $0x58] sm:$0xff]
    %v29 = vld [vmem:[%s1 + $0x60] sm:$0xff]
    %v30 = vld [vmem:[%s1 + $0x68] sm:$0xff]
    %v31 = vld [vmem:[%s1 + $0x70] sm:$0xff]
    %v32 = vld [vmem:[%s1 + $0x78] sm:$0xff]
    %v33 = vld [vmem:[%s1 + $0x80] sm:$0xff]
    %v34 = vld [vmem:[%s1 + $0x88] sm:$0xff]
    %v35 = vld [vmem:[%s1 + $0x90] sm:$0xff]
    %v36 = vld [vmem:[%s1 + $0x98] sm:$0xff]
    %v37 = vld [vmem:[%s1 + $0xa0] sm:$0xff]
    %v38 = vld [vmem:[%s1 + $0xa8] sm:$0xff]
    %v39 = vld [vmem:[%s1 + $0xb0] sm:$0xff]
    %v40 = vld [vmem:[%s1 + $0xb8] sm:$0xff]
    %v41 = vld [vmem:[%s1 + $0xc0] sm:$0xff]
    %v42 = vld [vmem:[%s1 + $0xc8] sm:$0xff]
    %v43 = vld [vmem:[%s1 + $0xd0] sm:$0xff]
    %v44 = vld [vmem:[%s1 + $0xd8] sm:$0xff]
    %v45 = vld [vmem:[%s1 + $0xe0] sm:$0xff]
    %v46 = vld [vmem:[%s1 + $0xe8] sm:$0xff]
    %v47 = vld [vmem:[%s1 + $0xf0] sm:$0xff]
    %v48 = vld [vmem:[%s1 + $0xf8] sm:$0xff]
    %v49 = vld [vmem:[%s2] sm:$0x1]
    %v51 = vlaneseq
    %v52 = vshrl.u32 %v51, 7
    %v53 = vsub.s32 0, %v52
    %v54 = vrot.slane %v49, %v53
    %56 = vmatprep.subr.mxu0 0.0
    %57 = vmatpush1.msra.mxu0 %v17
    %58 = vmatprep.subr.mxu0 0.0
    %59 = vmatpush1.msra.mxu0 %v18
    %60 = vmatprep.subr.mxu0 0.0
    %61 = vmatpush1.msra.mxu0 %v19
    %62 = vmatprep.subr.mxu0 0.0
    %63 = vmatpush1.msra.mxu0 %v20
    %64 = vmatprep.subr.mxu0 0.0
    %65 = vmatpush1.msra.mxu0 %v21
    %66 = vmatprep.subr.mxu0 0.0
    %67 = vmatpush1.msra.mxu0 %v22
    %68 = vmatprep.subr.mxu0 0.0
    %69 = vmatpush1.msra.mxu0 %v23
    %70 = vmatprep.subr.mxu0 0.0
    %71 = vmatpush1.msra.mxu0 %v24
    %72 = vmatprep.subr.mxu0 0.0
    %73 = vmatpush1.msra.mxu0 %v25
    %74 = vmatprep.subr.mxu0 0.0
    %75 = vmatpush1.msra.mxu0 %v26
    %76 = vmatprep.subr.mxu0 0.0
    %77 = vmatpush1.msra.mxu0 %v27
    %78 = vmatprep.subr.mxu0 0.0
    %79 = vmatpush1.msra.mxu0 %v28
    %80 = vmatprep.subr.mxu0 0.0
    %81 = vmatpush1.msra.mxu0 %v29
    %82 = vmatprep.subr.mxu0 0.0
    %83 = vmatpush1.msra.mxu0 %v30
    %84 = vmatprep.subr.mxu0 0.0
    %85 = vmatpush1.msra.mxu0 %v31
    %86 = vmatprep.subr.mxu0 0.0
    %87 = vmatpush1.msra.mxu0 %v32
    %88 = vmatprep.subr.mxu0 0.0
    %89 = vmatpush1.msra.mxu0 %v33
    %90 = vmatprep.subr.mxu0 0.0
    %91 = vmatpush1.msra.mxu0 %v34
    %92 = vmatprep.subr.mxu0 0.0
    %93 = vmatpush1.msra.mxu0 %v35
    %94 = vmatprep.subr.mxu0 0.0
    %95 = vmatpush1.msra.mxu0 %v36
    %96 = vmatprep.subr.mxu0 0.0
    %97 = vmatpush1.msra.mxu0 %v37
    %98 = vmatprep.subr.mxu0 0.0
    %99 = vmatpush1.msra.mxu0 %v38
    %100 = vmatprep.subr.mxu0 0.0
    %101 = vmatpush1.msra.mxu0 %v39
    %102 = vmatprep.subr.mxu0 0.0
    %103 = vmatpush1.msra.mxu0 %v40
    %104 = vmatprep.subr.mxu0 0.0
    %105 = vmatpush1.msra.mxu0 %v41
    %106 = vmatprep.subr.mxu0 0.0
    %107 = vmatpush1.msra.mxu0 %v42
    %108 = vmatprep.subr.mxu0 0.0
    %109 = vmatpush1.msra.mxu0 %v43
    %110 = vmatprep.subr.mxu0 0.0
    %111 = vmatpush1.msra.mxu0 %v44
    %112 = vmatprep.subr.mxu0 0.0
    %113 = vmatpush1.msra.mxu0 %v45
    %114 = vmatprep.subr.mxu0 0.0
    %115 = vmatpush1.msra.mxu0 %v46
    %116 = vmatprep.subr.mxu0 0.0
    %117 = vmatpush1.msra.mxu0 %v47
    %118 = vmatprep.subr.mxu0 0.0
    %119 = vmatpush1.msra.mxu0 %v48
    %120 = vmatprep.mubr.f32.mxu0 %v16
    %121 = vmatmul.mubr.f32.gmra.mrb[0].mxu0 %v15
    %v122 = vpop.f32.mrb[0].mxu0
    %v123 = vadd.f32 %v54, %v122
    %v124 = vpop.f32.mrb[0].mxu0
    %125 = vdwg.mxu0
    %126 = vst [vmem:[#allocation2] sm:$0xff] %v123
    // Predicated region
    $region14: #{patch_embed_forward.1} parent=1 // pred_check
      _
    $region15: #{patch_embed_forward.1} parent=1 // pred_check_branch
      %128 = sbr.rel (0) target = $region17
    $region16: #{patch_embed_forward.1} parent=1 // pred_region
      %s130 = ssub.s32 128, 128
      %131 = vsyncadd [#allocation3], %s130
      %s133 = sshll.u32 [#allocation2], 4
      %s134 = int_to_ptr.vmem [resolvable:$true] %s133
      %136 = dma.vmem_to_hbm [thread:$0]  %s134, 128, %s3, [#allocation3]
    $region17: #{patch_embed_forward.1} parent=1 // pred_fallthru
      _
    // Predicated region
    $region18: #{patch_embed_forward.1} parent=1 // pred_check
      _
    $region19: #{patch_embed_forward.1} parent=1 // pred_check_branch
      %138 = sbr.rel (0) target = $region21
    $region20: #{patch_embed_forward.1} parent=1 // pred_region
      %139 = dma.done [#allocation3], 128
    $region21: #{patch_embed_forward.1} parent=1 // pred_fallthru
      _
    %140 = vsyncpa [#allocation3], 1

</llo_original>
